<compile_context>
chip_gen: v5e
topology: v5e:2x2
jax: 0.10.0
libtpu: 0.0.40
codegen_flags: <defaults>
</compile_context>

<pallas_src>
import math
from functools import partial

import jax
import jax.numpy as jnp
from jax.experimental import pallas as pl
from jax.experimental.pallas import tpu as pltpu


_MXU_SEGSUM_MAX_DFOLDED = 512   # keep the block-diagonal matrix small/resident
_MAX_FOLD = 16                  # beyond this the per-segment work outweighs lane density


# ---------------------------------------------------------------------------
# Kernels
# ---------------------------------------------------------------------------
def _ln_kernel(x_ref, gamma_ref, beta_ref, o_ref, *, eps):
    """fold == 1: each output row is one full normalization group."""
    x = x_ref[...].astype(jnp.float32)
    inv_n = jnp.float32(1.0 / x.shape[-1])
    mean = jnp.sum(x, axis=-1, keepdims=True) * inv_n
    # Single-pass moments; clamp tiny negative cancellation before rsqrt.
    var = jnp.maximum(jnp.sum(x * x, axis=-1, keepdims=True) * inv_n - mean * mean, 0.0)
    inv_std = jax.lax.rsqrt(var + jnp.float32(eps))
    # Re-read x for the normalize+store pass so the first read's registers die.
    x2 = x_ref[...].astype(jnp.float32)
    o_ref[...] = (gamma_ref[...] * ((x2 - mean) * inv_std) + beta_ref[...]).astype(o_ref.dtype)


def _ln_kernel_fold_mxu(x_ref, gamma_ref, beta_ref, seg_ref, o_ref, *, eps, d_model):
    """fold > 1, d_folded <= 512: per-segment sums via the (idle) MXU.

    seg_ref is a resident (d_folded, d_folded) block-diagonal 0/1 f32 matrix;
    dot(x, seg) gives each segment's sum already broadcast to its lanes.
    """
    inv_n = jnp.float32(1.0 / d_model)
    x = x_ref[...].astype(jnp.float32)
    s = seg_ref[...]
    mean = jnp.dot(x, s, preferred_element_type=jnp.float32) * inv_n
    centered = x - mean
    var = jnp.dot(centered * centered, s, preferred_element_type=jnp.float32) * inv_n
    inv_std = jax.lax.rsqrt(var + jnp.float32(eps))
    o_ref[...] = (gamma_ref[...] * (centered * inv_std) + beta_ref[...]).astype(o_ref.dtype)


def _ln_kernel_fold_masked(x_ref, gamma_ref, beta_ref, o_ref, *, eps, d_model, fold):
    """fold > 1, large d_folded: single fused masked pass over segments."""
    d_folded = fold * d_model
    inv_n = jnp.float32(1.0 / d_model)
    x = x_ref[...].astype(jnp.float32)
    seg = jax.lax.broadcasted_iota(jnp.int32, (1, d_folded), 1) // d_model
    sum1 = jnp.zeros_like(x)
    sum2 = jnp.zeros_like(x)
    for s in range(fold):               # small static unroll; one pass for both moments
        m = seg == s
        xm = jnp.where(m, x, 0.0)
        r1 = jnp.sum(xm, axis=-1, keepdims=True)
        r2 = jnp.sum(xm * xm, axis=-1, keepdims=True)
        sum1 = sum1 + jnp.where(m, r1, 0.0)
        sum2 = sum2 + jnp.where(m, r2, 0.0)
    mean = sum1 * inv_n
    var = jnp.maximum(sum2 * inv_n - mean * mean, 0.0)
    inv_std = jax.lax.rsqrt(var + jnp.float32(eps))
    o_ref[...] = (gamma_ref[...] * ((x - mean) * inv_std) + beta_ref[...]).astype(o_ref.dtype)


# ---------------------------------------------------------------------------
# Tiling heuristics
# ---------------------------------------------------------------------------
def _choose_tile_rows(frows, d_folded, io_itemsize, vmem_budget_bytes, row_align,
                      x_buffers, n_f32_temps):
    """Row tile from a VMEM budget, shaped so the grid is even (>= 4 steps for
    large inputs) so v7x's two TensorCores stay balanced and pipelined."""
    bytes_per_row = d_folded * ((x_buffers + 2) * io_itemsize + n_f32_temps * 4)
    tm = int(vmem_budget_bytes // max(bytes_per_row, 1))
    tm = min(tm, 1024)                       # 512-1024 row tiles ~saturate HBM BW
    tm = max((tm // row_align) * row_align, row_align)
    if tm >= frows:
        return int(frows)                    # single block == full array (no masking)
    grid = int(pl.cdiv(frows, tm))
    if frows >= 4 * 512:
        grid = max(grid, 4)                  # >= 4 steps -> per-core pipelining on v7x
    if grid % 2:
        grid += 1                            # even grid -> no 2-TensorCore imbalance
    tm = int(pl.cdiv(int(pl.cdiv(frows, grid)), row_align)) * row_align
    return int(max(tm, row_align))


# ---------------------------------------------------------------------------
# Wrapper
# ---------------------------------------------------------------------------
def layer_norm(x, gamma, beta, *, eps=1e-5):
    """LayerNorm over the last axis of x.  x: (..., d_model)."""
    orig_shape = x.shape
    d_model = int(orig_shape[-1])
    rows = int(math.prod(orig_shape[:-1])) if len(orig_shape) > 1 else 1
    x2 = x.reshape(rows, d_model)

    # Generation-aware VMEM budgets (v7x has 64 MiB physical / 32 MiB scoped).
    try:
        vmem_cap = int(pltpu.get_tpu_info().vmem_capacity_bytes)
    except Exception:
        vmem_cap = 64 << 20                 # conservative fallback
    small_vmem = vmem_cap <= (64 << 20)
    vmem_budget = (20 << 20) if small_vmem else (24 << 20)
    vmem_limit_cap = (30 << 20) if small_vmem else (64 << 20)
    pipeline_depth = 2 if small_vmem else 3  # Buffered(3) only on 128 MiB parts

    # Lane-dense fold for small d_model: fold rows so fold*d_model % 128 == 0.
    fold = 1
    if d_model < 128:
        f = 128 // math.gcd(d_model, 128)
        if f <= _MAX_FOLD:
            fold = f

    gamma32 = gamma.astype(jnp.float32).reshape(-1)
    beta32 = beta.astype(jnp.float32).reshape(-1)

    if fold > 1:
        rows_f = int(pl.cdiv(rows, fold)) * fold
        if rows_f != rows:
            # TODO(synk): this small fold-alignment pad (< fold rows) still costs a
            # full XLA copy; only hit when rows is not a multiple of fold.
            x2 = jnp.pad(x2, ((0, rows_f - rows), (0, 0)))
        xf = x2.reshape(rows_f // fold, fold * d_model)
        gamma_f = jnp.tile(gamma32, fold).reshape(1, fold * d_model)
        beta_f = jnp.tile(beta32, fold).reshape(1, fold * d_model)
    else:
        rows_f = rows
        xf = x2
        gamma_f = gamma32.reshape(1, d_model)
        beta_f = beta32.reshape(1, d_model)

    frows, d_folded = int(xf.shape[0]), int(xf.shape[1])
    io_itemsize = jnp.dtype(x.dtype).itemsize
    row_align = max(8, 32 // io_itemsize)    # (8,128) f32 / (16,128) bf16 / (32,128) 8-bit

    use_mxu = fold > 1 and d_folded <= _MXU_SEGSUM_MAX_DFOLDED
    n_f32_temps = 3 if fold > 1 else 2
    resident_bytes = 2 * d_folded * 4 + (d_folded * d_folded * 4 if use_mxu else 0)

    tm = _choose_tile_rows(frows, d_folded, io_itemsize,
                           max(vmem_budget - resident_bytes, 1 << 20),
                           row_align, pipeline_depth, n_f32_temps)
    grid = int(pl.cdiv(frows, tm))           # ragged last block handled by Pallas

    # Input pipeline depth: 3 only when the grid is long enough to use it.
    x_buffers = pipeline_depth if (pipeline_depth > 2 and grid >= pipeline_depth) else 2

    needed = (tm * d_folded * (x_buffers + 2) * io_itemsize
              + tm * d_folded * n_f32_temps * 4
              + resident_bytes)
    vmem_limit = int(min(max(needed + (4 << 20), 16 << 20), vmem_limit_cap))

    # Block specs.
    x_index_map = lambda i: (i, 0)
    if x_buffers > 2:
        try:
            x_spec = pl.BlockSpec((tm, d_folded), x_index_map,
                                  pipeline_mode=pl.Buffered(x_buffers))
        except TypeError:                     # BlockSpec without pipeline_mode support
            x_spec = pl.BlockSpec((tm, d_folded), x_index_map)
    else:
        x_spec = pl.BlockSpec((tm, d_folded), x_index_map)

    in_specs = [
        x_spec,
        pl.BlockSpec((1, d_folded), lambda i: (0, 0)),   # gamma (resident)
        pl.BlockSpec((1, d_folded), lambda i: (0, 0)),   # beta (resident)
    ]
    kernel_inputs = [xf, gamma_f, beta_f]

    if fold == 1:
        kern = partial(_ln_kernel, eps=float(eps))
    elif use_mxu:
        lane = jnp.arange(d_folded, dtype=jnp.int32) // d_model
        seg_mat = (lane[:, None] == lane[None, :]).astype(jnp.float32)
        kernel_inputs.append(seg_mat)
        in_specs.append(pl.BlockSpec((d_folded, d_folded), lambda i: (0, 0)))
        kern = partial(_ln_kernel_fold_mxu, eps=float(eps), d_model=d_model)
    else:
        kern = partial(_ln_kernel_fold_masked, eps=float(eps), d_model=d_model, fold=fold)

    n_elems = rows * d_model
    mxu_flops = 4 * frows * d_folded * d_folded if use_mxu else 0
    cost = pl.CostEstimate(
        flops=int(8 * n_elems + mxu_flops),
        transcendentals=int(rows),
        bytes_accessed=int(2 * n_elems * io_itemsize + 2 * d_model * 4 + resident_bytes),
    )

    out = pl.pallas_call(
        kern,
        out_shape=jax.ShapeDtypeStruct((frows, d_folded), x.dtype),
        grid_spec=pltpu.PrefetchScalarGridSpec(
            num_scalar_prefetch=0,
            grid=(grid,),
            in_specs=in_specs,
            out_specs=pl.BlockSpec((tm, d_folded), lambda i: (i, 0)),
        ),
        compiler_params=pltpu.CompilerParams(
            dimension_semantics=("parallel",),
            vmem_limit_bytes=vmem_limit,
        ),
        cost_estimate=cost,
    )(*kernel_inputs)

    if fold > 1:
        out = out.reshape(rows_f, d_model)
        if rows_f != rows:
            out = out[:rows]
    return out.reshape(orig_shape)


# ---------------------------------------------------------------------------
if __name__ == "__main__":
    batch, seq, d_model = 2, 8, 32

    key = jax.random.PRNGKey(0)
    x = jax.random.normal(key, (batch, seq, d_model), dtype=jnp.float32)

    # Parameters exactly as in LayerNorm.__init__: gamma = ones, beta = zeros.
    gamma = jnp.ones((d_model,), dtype=jnp.float32)
    beta = jnp.zeros((d_model,), dtype=jnp.float32)

    y = layer_norm(x, gamma, beta, eps=1e-5)
    jax.block_until_ready(y)

    # Reference in plain JAX (same semantics as the PyTorch module).
    mean = jnp.mean(x, axis=-1, keepdims=True)
    var = jnp.mean((x - mean) ** 2, axis=-1, keepdims=True)
    ref = gamma * (x - mean) / jnp.sqrt(var + 1e-5) + beta
    assert jnp.allclose(y, ref, atol=1e-5, rtol=1e-5), "mismatch vs reference"

    print("KERNEL_OK")
</pallas_src>

<mosaic_0001>
module attributes {stable_mosaic.version = 11 : i64} {
  func.func @_ln_kernel_fold_mxu(%arg0: i32, %arg1: memref<4x128xf32, #tpu.memory_space<vmem>>, %arg2: memref<1x128xf32, #tpu.memory_space<vmem>>, %arg3: memref<1x128xf32, #tpu.memory_space<vmem>>, %arg4: memref<128x128xf32, #tpu.memory_space<vmem>>, %arg5: memref<4x128xf32, #tpu.memory_space<vmem>>) attributes {dimension_semantics = [#tpu.dimension_semantics<parallel>], iteration_bounds = array<i64: 1>, scalar_prefetch = 0 : i64, scratch_operands = 0 : i64, tpu.core_type = #tpu.core_type<tc>, window_params = [{transform_indices = @transform_0, window_bounds = array<i64: 4, 128>}, {pipeline_mode = #tpu.pipeline_mode<synchronous>, transform_indices = @transform_1, window_bounds = array<i64: 1, 128>}, {pipeline_mode = #tpu.pipeline_mode<synchronous>, transform_indices = @transform_2, window_bounds = array<i64: 1, 128>}, {pipeline_mode = #tpu.pipeline_mode<synchronous>, transform_indices = @transform_3, window_bounds = array<i64: 128, 128>}, {transform_indices = @transform_4, window_bounds = array<i64: 4, 128>}]} {
    %c0 = arith.constant 0 : index
    %c0_0 = arith.constant 0 : index
    %0 = vector.load %arg1[%c0, %c0_0] : memref<4x128xf32, #tpu.memory_space<vmem>>, vector<4x128xf32>
    %c0_1 = arith.constant 0 : index
    %c0_2 = arith.constant 0 : index
    %1 = vector.load %arg4[%c0_1, %c0_2] : memref<128x128xf32, #tpu.memory_space<vmem>>, vector<128x128xf32>
    %cst = arith.constant dense<0.000000e+00> : vector<4x128xf32>
    %2 = tpu.matmul %0, %1, %cst {dimension_numbers = #tpu.dot_dimension_numbers<[1], [0], [0], [1], [0, 0, 1, 1], [], []>} : vector<4x128xf32>, vector<128x128xf32>, vector<4x128xf32> -> vector<4x128xf32>
    %cst_3 = arith.constant 3.125000e-02 : f32
    %3 = vector.broadcast %cst_3 : f32 to vector<4x128xf32>
    %4 = arith.mulf %2, %3 : vector<4x128xf32>
    %5 = arith.subf %0, %4 : vector<4x128xf32>
    %6 = arith.mulf %5, %5 : vector<4x128xf32>
    %cst_4 = arith.constant dense<0.000000e+00> : vector<4x128xf32>
    %7 = tpu.matmul %6, %1, %cst_4 {dimension_numbers = #tpu.dot_dimension_numbers<[1], [0], [0], [1], [0, 0, 1, 1], [], []>} : vector<4x128xf32>, vector<128x128xf32>, vector<4x128xf32> -> vector<4x128xf32>
    %cst_5 = arith.constant 3.125000e-02 : f32
    %8 = vector.broadcast %cst_5 : f32 to vector<4x128xf32>
    %9 = arith.mulf %7, %8 : vector<4x128xf32>
    %cst_6 = arith.constant 9.99999974E-6 : f32
    %10 = vector.broadcast %cst_6 : f32 to vector<4x128xf32>
    %11 = arith.addf %9, %10 : vector<4x128xf32>
    %12 = math.rsqrt %11 : vector<4x128xf32>
    %c0_7 = arith.constant 0 : index
    %c0_8 = arith.constant 0 : index
    %13 = vector.load %arg2[%c0_7, %c0_8] : memref<1x128xf32, #tpu.memory_space<vmem>>, vector<1x128xf32>
    %14 = arith.mulf %5, %12 : vector<4x128xf32>
    %15 = vector.broadcast %13 : vector<1x128xf32> to vector<4x128xf32>
    %16 = arith.mulf %15, %14 : vector<4x128xf32>
    %c0_9 = arith.constant 0 : index
    %c0_10 = arith.constant 0 : index
    %17 = vector.load %arg3[%c0_9, %c0_10] : memref<1x128xf32, #tpu.memory_space<vmem>>, vector<1x128xf32>
    %18 = vector.broadcast %17 : vector<1x128xf32> to vector<4x128xf32>
    %19 = arith.addf %16, %18 : vector<4x128xf32>
    %c0_11 = arith.constant 0 : index
    %c0_12 = arith.constant 0 : index
    %20 = vector.load %arg5[%c0_11, %c0_12] : memref<4x128xf32, #tpu.memory_space<vmem>>, vector<4x128xf32>
    tpu.vector_store %arg5[%c0_11, %c0_12], %19 {strides = array<i32>} : memref<4x128xf32, #tpu.memory_space<vmem>>, vector<4x128xf32>,
    return
  }
  func.func @transform_0(%arg0: i32) -> (i32, i32) {
    %c0_i32 = arith.constant 0 : i32
    %c0_i32_0 = arith.constant 0 : i32
    return %arg0, %c0_i32 : i32, i32
  }
  func.func @transform_1(%arg0: i32) -> (i32, i32) {
    %c0_i32 = arith.constant 0 : i32
    %c0_i32_0 = arith.constant 0 : i32
    %c0_i32_1 = arith.constant 0 : i32
    return %c0_i32, %c0_i32_0 : i32, i32
  }
  func.func @transform_2(%arg0: i32) -> (i32, i32) {
    %c0_i32 = arith.constant 0 : i32
    %c0_i32_0 = arith.constant 0 : i32
    %c0_i32_1 = arith.constant 0 : i32
    return %c0_i32, %c0_i32_0 : i32, i32
  }
  func.func @transform_3(%arg0: i32) -> (i32, i32) {
    %c0_i32 = arith.constant 0 : i32
    %c0_i32_0 = arith.constant 0 : i32
    %c0_i32_1 = arith.constant 0 : i32
    return %c0_i32, %c0_i32_0 : i32, i32
  }
  func.func @transform_4(%arg0: i32) -> (i32, i32) {
    %c0_i32 = arith.constant 0 : i32
    %c0_i32_0 = arith.constant 0 : i32
    return %arg0, %c0_i32 : i32, i32
  }
}

</mosaic_0001>

<llo_original>
// kernel: tpu_custom_call.1
$region0: #{tpu_custom_call.1}
  #allocation0 [shape = 'u32[]', space=smem, size = 0x4, offset = 0x4, fixed_abs, tag = 'smem constant byte address 0x4 - core index']
  #allocation1 [shape = 'u32[72,128]{1,0:T(1,128)}', space=vmem, size = 0x9000, scoped, tag = 'internal scratch']
  %s0 = inlined_call_operand.hbm [shape: f32[4,128], index: 0, kind: input, shape index: {}]
  %s1 = inlined_call_operand.hbm [shape: f32[1,128], index: 1, kind: input, shape index: {}]
  %s2 = inlined_call_operand.vmem [shape: f32[1,128], index: 2, kind: input, shape index: {}]
  %s3 = inlined_call_operand.hbm [shape: f32[128,128], index: 3, kind: input, shape index: {}]
  %s4 = inlined_call_operand.hbm [shape: f32[4,128], index: 4, kind: output, shape index: {}]
  %s5 = sld [smem:[#allocation0]]
  $region38: #{tpu_custom_call.1} parent=0
    _
  %s7 = ssub.s32 1, %s5
  %s8 = scalar_select 0, %s7, %s5
  $region1: #{tpu_custom_call.1} parent=0
    #allocation2 [shape = 'u8[2048]{0}', space=vmem, size = 0x800, scoped, tag = 'input window, operand 0, single buffered']
    #allocation3 [shape = 's32[1]{0}', space=sflag, size = 0x4, scoped, tag = 'scoped memory for tpu_custom_call.1']
    #allocation4 [shape = 's32[1]{0}', space=sflag, size = 0x4, scoped, tag = 'scoped memory for tpu_custom_call.1']
    #allocation5 [shape = 'u8[512]{0}', space=vmem, size = 0x400, scoped, tag = 'input window, operand 1, single buffered']
    #allocation6 [shape = 's32[1]{0}', space=sflag, size = 0x4, scoped, tag = 'scoped memory for tpu_custom_call.1']
    #allocation7 [shape = 'u8[65536]{0}', space=vmem, size = 0x10000, scoped, tag = 'input window, operand 3, single buffered']
    #allocation8 [shape = 'u8[2048]{0}', space=vmem, size = 0x800, scoped, tag = 'output window, operand 0, single buffered']
    %9 = vsyncpa [#allocation3], 0
    %10 = vsyncpa [#allocation6], 0
    %11 = vsyncpa [#allocation4], 0
    // Predicated region
    $region2: #{tpu_custom_call.1} parent=1 // pred_check
      _
    $region3: #{tpu_custom_call.1} parent=1 // pred_check_branch
      %13 = sbr.rel (0) target = $region5
    $region4: #{tpu_custom_call.1} parent=1 // pred_region
      %15 = vsyncadd [#allocation3], 0
      %s17 = sshll.u32 %s0, 4
      %s18 = int_to_ptr.hbm [resolvable:$true] %s17
      %s19 = sshll.u32 [#allocation2], 4
      %s20 = int_to_ptr.vmem [resolvable:$true] %s19
      %22 = dma.hbm_to_vmem [thread:$0]  %s18, 64, %s20, [#allocation3]
    $region5: #{tpu_custom_call.1} parent=1 // pred_fallthru
      _
    // Predicated region
    $region6: #{tpu_custom_call.1} parent=1 // pred_check
      _
    $region7: #{tpu_custom_call.1} parent=1 // pred_check_branch
      %24 = sbr.rel (0) target = $region9
    $region8: #{tpu_custom_call.1} parent=1 // pred_region
      %26 = vsyncadd [#allocation6], 0
      %s28 = sshll.u32 %s1, 4
      %s29 = int_to_ptr.hbm [resolvable:$true] %s28
      %s30 = sshll.u32 [#allocation5], 4
      %s31 = int_to_ptr.vmem [resolvable:$true] %s30
      %33 = dma.hbm_to_vmem [thread:$0]  %s29, 16, %s31, [#allocation6]
    $region9: #{tpu_custom_call.1} parent=1 // pred_fallthru
      _
    // Predicated region
    $region10: #{tpu_custom_call.1} parent=1 // pred_check
      _
    $region11: #{tpu_custom_call.1} parent=1 // pred_check_branch
      %35 = sbr.rel (0) target = $region13
    $region12: #{tpu_custom_call.1} parent=1 // pred_region
      _
    $region13: #{tpu_custom_call.1} parent=1 // pred_fallthru
      _
    // Predicated region
    $region14: #{tpu_custom_call.1} parent=1 // pred_check
      _
    $region15: #{tpu_custom_call.1} parent=1 // pred_check_branch
      %37 = sbr.rel (0) target = $region17
    $region16: #{tpu_custom_call.1} parent=1 // pred_region
      %39 = vsyncadd [#allocation6], 0
      %s40 = sshll.u32 %s3, 4
      %s41 = int_to_ptr.hbm [resolvable:$true] %s40
      %s42 = sshll.u32 [#allocation7], 4
      %s43 = int_to_ptr.vmem [resolvable:$true] %s42
      %48 = dma.hbm_to_vmem [thread:$0]  %s41, 2048, %s43, [#allocation6], 128, 128, 8
    $region17: #{tpu_custom_call.1} parent=1 // pred_fallthru
      _
    // Predicated region
    $region18: #{tpu_custom_call.1} parent=1 // pred_check
      _
    $region19: #{tpu_custom_call.1} parent=1 // pred_check_branch
      %50 = sbr.rel (0) target = $region21
    $region20: #{tpu_custom_call.1} parent=1 // pred_region
      %52 = dma.done [#allocation3], 64
    $region21: #{tpu_custom_call.1} parent=1 // pred_fallthru
      _
    // Predicated region
    $region22: #{tpu_custom_call.1} parent=1 // pred_check
      _
    $region23: #{tpu_custom_call.1} parent=1 // pred_check_branch
      %54 = sbr.rel (0) target = $region25
    $region24: #{tpu_custom_call.1} parent=1 // pred_region
      %56 = dma.done [#allocation6], 16
    $region25: #{tpu_custom_call.1} parent=1 // pred_fallthru
      _
    // Predicated region
    $region26: #{tpu_custom_call.1} parent=1 // pred_check
      _
    $region27: #{tpu_custom_call.1} parent=1 // pred_check_branch
      %58 = sbr.rel (0) target = $region29
    $region28: #{tpu_custom_call.1} parent=1 // pred_region
      %60 = dma.done [#allocation6], 2048
    $region29: #{tpu_custom_call.1} parent=1 // pred_fallthru
      _
    %v61 = vld [vmem:[#allocation2] sm:$0xf]
    %v62 = vld [vmem:[#allocation7] sm:$0xff]
    %v63 = vld [vmem:[#allocation7 + $0x8] sm:$0xff]
    %v64 = vld [vmem:[#allocation7 + $0x10] sm:$0xff]
    %v65 = vld [vmem:[#allocation7 + $0x18] sm:$0xff]
    %v66 = vld [vmem:[#allocation7 + $0x20] sm:$0xff]
    %v67 = vld [vmem:[#allocation7 + $0x28] sm:$0xff]
    %v68 = vld [vmem:[#allocation7 + $0x30] sm:$0xff]
    %v69 = vld [vmem:[#allocation7 + $0x38] sm:$0xff]
    %v70 = vld [vmem:[#allocation7 + $0x40] sm:$0xff]
    %v71 = vld [vmem:[#allocation7 + $0x48] sm:$0xff]
    %v72 = vld [vmem:[#allocation7 + $0x50] sm:$0xff]
    %v73 = vld [vmem:[#allocation7 + $0x58] sm:$0xff]
    %v74 = vld [vmem:[#allocation7 + $0x60] sm:$0xff]
    %v75 = vld [vmem:[#allocation7 + $0x68] sm:$0xff]
    %v76 = vld [vmem:[#allocation7 + $0x70] sm:$0xff]
    %v77 = vld [vmem:[#allocation7 + $0x78] sm:$0xff]
    %78 = vmatpush.msra.mxu0 %v77
    %79 = vmatpush.msra.mxu0 %v76
    %80 = vmatpush.msra.mxu0 %v75
    %81 = vmatpush.msra.mxu0 %v74
    %82 = vmatpush.msra.mxu0 %v73
    %83 = vmatpush.msra.mxu0 %v72
    %84 = vmatpush.msra.mxu0 %v71
    %85 = vmatpush.msra.mxu0 %v70
    %86 = vmatpush.msra.mxu0 %v69
    %87 = vmatpush.msra.mxu0 %v68
    %88 = vmatpush.msra.mxu0 %v67
    %89 = vmatpush.msra.mxu0 %v66
    %90 = vmatpush.msra.mxu0 %v65
    %91 = vmatpush.msra.mxu0 %v64
    %92 = vmatpush.msra.mxu0 %v63
    %93 = vmatpush.msra.mxu0 %v62
    %94 = vmatmul.f32.gmra.mxu0 %v61
    %v95 = vpop.f32.mrf.mxu0
    %v96 = vadd.f32 0.0, %v95
    %97 = vdwg.mxu0
    %v98 = vmul.f32 %v96, 0.03125
    %v99 = vsub.f32 %v61, %v98
    %v100 = vmul.f32 %v99, %v99
    %101 = vmatpush.msra.mxu0 %v77
    %102 = vmatpush.msra.mxu0 %v76
    %103 = vmatpush.msra.mxu0 %v75
    %104 = vmatpush.msra.mxu0 %v74
    %105 = vmatpush.msra.mxu0 %v73
    %106 = vmatpush.msra.mxu0 %v72
    %107 = vmatpush.msra.mxu0 %v71
    %108 = vmatpush.msra.mxu0 %v70
    %109 = vmatpush.msra.mxu0 %v69
    %110 = vmatpush.msra.mxu0 %v68
    %111 = vmatpush.msra.mxu0 %v67
    %112 = vmatpush.msra.mxu0 %v66
    %113 = vmatpush.msra.mxu0 %v65
    %114 = vmatpush.msra.mxu0 %v64
    %115 = vmatpush.msra.mxu0 %v63
    %116 = vmatpush.msra.mxu0 %v62
    %117 = vmatmul.f32.gmra.mxu0 %v100
    %v118 = vpop.f32.mrf.mxu0
    %v119 = vadd.f32 0.0, %v118
    %120 = vdwg.mxu0
    %v121 = vmul.f32 %v119, 0.03125
    %v122 = vadd.f32 %v121, 1e-05
    %v123 = vrsqrt.pop %v122
    %v124 = vmul.f32 %v123, %v122
    %v125 = vmul.f32 %v124, %v123
    %v126 = vmul.f32 0.5, %v125
    %v127 = vsub.f32 1.5, %v126
    %v128 = vmul.f32 %v123, %v127
    %vm129 = vweird.f32 %v122
    %vm130 = vweird.f32 %v123
    %vm131 = vmor %vm129, %vm130
    %v132 = vsel %vm131, %v123, %v128
    %v133 = vld [vmem:[#allocation5] sm:$0x1]
    %v134 = vmul.f32 %v99, %v132
    %v136 = vperm.slane %v133, 0
    %v138 = vmul.f32 %v136, %v134
    %v139 = vld [vmem:[%s2] sm:$0x1]
    %v141 = vperm.slane %v139, 0
    %v143 = vadd.f32 %v138, %v141
    %144 = vst [vmem:[#allocation8] sm:$0xf] %v143
    // Predicated region
    $region30: #{tpu_custom_call.1} parent=1 // pred_check
      _
    $region31: #{tpu_custom_call.1} parent=1 // pred_check_branch
      %146 = sbr.rel (0) target = $region33
    $region32: #{tpu_custom_call.1} parent=1 // pred_region
      %148 = vsyncadd [#allocation4], 0
      %s150 = sshll.u32 [#allocation8], 4
      %s151 = int_to_ptr.vmem [resolvable:$true] %s150
      %s152 = sshll.u32 %s4, 4
      %s153 = int_to_ptr.hbm [resolvable:$true] %s152
      %155 = dma.vmem_to_hbm [thread:$0]  %s151, 64, %s153, [#allocation4]
    $region33: #{tpu_custom_call.1} parent=1 // pred_fallthru
      _
    // Predicated region
    $region34: #{tpu_custom_call.1} parent=1 // pred_check
      _
    $region35: #{tpu_custom_call.1} parent=1 // pred_check_branch
      %157 = sbr.rel (0) target = $region37
    $region36: #{tpu_custom_call.1} parent=1 // pred_region
      %159 = dma.done [#allocation4], 64
    $region37: #{tpu_custom_call.1} parent=1 // pred_fallthru
      _
    %160 = vsyncpa [#allocation3], 1
    %161 = vsyncpa [#allocation6], 1
    %162 = vsyncpa [#allocation4], 1

</llo_original>
